<compile_context>
chip_gen: v6e
topology: v6e:2x2x1
jax: 0.10.0
libtpu: 0.0.40
codegen_flags: <defaults>
</compile_context>

<pallas_src>
import jax
import jax.numpy as jnp
from jax.experimental import pallas as pl
from jax.experimental.pallas import tpu as pltpu


_LANES = 128           # lane-dense last dim (unmasked vld/vst)
_MAX_TILE_ROWS = 1024  # 1024x128 f32 = 512 KiB/buffer; 4 arrays x 2 bufs ~ 4 MiB VMEM


def _diag_gaussian_sample_kernel(bits_ref, mean_ref, log_std_ref, out_ref):
    """sample = mean + exp(log_std) * eps, eps ~ N(0,1) via Box-Muller.

    The (TR, 128) tile is split in half along the sublane axis: the lower
    half of the random bits gives u1, the upper half gives u2, and BOTH
    Box-Muller branches (r*cos(theta), r*sin(theta)) are written out, so the
    per-element EUP cost is ~0.5*log + 0.5*sqrt + 1 trig + 1 exp.
    """
    tr = mean_ref.shape[0]
    half = tr // 2

    b_lo = bits_ref[:half, :]   # int32 random bits
    b_hi = bits_ref[half:, :]

    mask24 = jnp.int32(0x00FFFFFF)
    inv24 = jnp.float32(1.0 / 16777216.0)  # 2**-24
    # u1 in (0, 1] (avoids log(0)), u2 in [0, 1)
    u1 = ((b_lo & mask24).astype(jnp.float32) + 1.0) * inv24
    u2 = (b_hi & mask24).astype(jnp.float32) * inv24

    r = jnp.sqrt(-2.0 * jnp.log(u1))
    theta = jnp.float32(2.0 * jnp.pi) * u2
    eps_lo = r * jnp.cos(theta)
    eps_hi = r * jnp.sin(theta)

    mean_lo = mean_ref[:half, :].astype(jnp.float32)
    mean_hi = mean_ref[half:, :].astype(jnp.float32)
    std_lo = jnp.exp(log_std_ref[:half, :].astype(jnp.float32))
    std_hi = jnp.exp(log_std_ref[half:, :].astype(jnp.float32))

    out_ref[:half, :] = (mean_lo + std_lo * eps_lo).astype(out_ref.dtype)
    out_ref[half:, :] = (mean_hi + std_hi * eps_hi).astype(out_ref.dtype)


def diagonal_gaussian_sample(mean, log_std, key):
    """JAX/Pallas equivalent of DiagonalGaussianSample.forward.

    The PyTorch module uses the global torch RNG; here the caller passes an
    explicit jax.random key for the noise.
    """
    assert mean.shape == log_std.shape, "mean and log_std must have the same shape"
    orig_shape = mean.shape
    out_dtype = mean.dtype

    total = int(mean.size)
    lanes = _LANES
    rows = pl.cdiv(total, lanes)

    # Tile rows: multiple of 16 so the in-kernel half-split is 8-sublane
    # aligned; capped so VMEM stays bounded regardless of latent size.
    tile_rows = min(_MAX_TILE_ROWS, ((rows + 15) // 16) * 16)
    padded_rows = ((rows + tile_rows - 1) // tile_rows) * tile_rows
    padded_total = padded_rows * lanes
    grid = (padded_rows // tile_rows,)

    def to_slab(x):
        flat = x.reshape(-1)
        if padded_total != total:
            flat = jnp.pad(flat, (0, padded_total - total))
        return flat.reshape(padded_rows, lanes)

    m2 = to_slab(mean)       # native dtype; upcast happens in-kernel
    s2 = to_slab(log_std)

    # One 32-bit word of entropy per output element (both Box-Muller branches
    # are used). Bitcast to int32 so in-kernel int->float converts are signed.
    bits = jax.random.bits(key, (padded_rows, lanes), dtype=jnp.uint32)
    bits = jax.lax.bitcast_convert_type(bits, jnp.int32)

    itemsize = jnp.dtype(out_dtype).itemsize
    cost = pl.CostEstimate(
        flops=12 * padded_total,
        transcendentals=3 * padded_total,
        bytes_accessed=4 * padded_total + 3 * itemsize * padded_total,
    )

    out = pl.pallas_call(
        _diag_gaussian_sample_kernel,
        out_shape=jax.ShapeDtypeStruct((padded_rows, lanes), out_dtype),
        grid=grid,
        in_specs=[
            pl.BlockSpec((tile_rows, lanes), lambda i: (i, 0)),   # bits
            pl.BlockSpec((tile_rows, lanes), lambda i: (i, 0)),   # mean
            pl.BlockSpec((tile_rows, lanes), lambda i: (i, 0)),   # log_std
        ],
        out_specs=pl.BlockSpec((tile_rows, lanes), lambda i: (i, 0)),
        compiler_params=pltpu.CompilerParams(
            # Grid steps are fully independent -> shard across TCs on v7x.
            dimension_semantics=("parallel",),
        ),
        cost_estimate=cost,
    )(bits, m2, s2)

    return out.reshape(-1)[:total].reshape(orig_shape)


if __name__ == "__main__":
    key = jax.random.PRNGKey(0)
    k_mean, k_logstd, k_noise = jax.random.split(key, 3)

    # Small NCHW latent consistent with the module: (B=2, C=4, H=16, W=16)
    B, C, H, W = 2, 4, 16, 16
    mean = jax.random.normal(k_mean, (B, C, H, W), dtype=jnp.float32)
    log_std = 0.1 * jax.random.normal(k_logstd, (B, C, H, W), dtype=jnp.float32)

    sample = diagonal_gaussian_sample(mean, log_std, k_noise)
    sample = jax.block_until_ready(sample)

    # Sanity checks: shape/dtype match and values are finite.
    assert sample.shape == mean.shape
    assert sample.dtype == mean.dtype
    assert bool(jnp.all(jnp.isfinite(sample)))

    # Loose statistical check: z = (sample - mean) / std should be ~ N(0, 1).
    z = (sample - mean) / jnp.exp(log_std)
    assert abs(float(jnp.mean(z))) < 0.2
    assert abs(float(jnp.std(z)) - 1.0) < 0.2

    print("KERNEL_OK")
</pallas_src>

<mosaic_0001>
module attributes {stable_mosaic.version = 11 : i64} {
  func.func @_diag_gaussian_sample_kernel(%arg0: i32, %arg1: memref<16x128xi32, #tpu.memory_space<vmem>>, %arg2: memref<16x128xf32, #tpu.memory_space<vmem>>, %arg3: memref<16x128xf32, #tpu.memory_space<vmem>>, %arg4: memref<16x128xf32, #tpu.memory_space<vmem>>) attributes {dimension_semantics = [#tpu.dimension_semantics<parallel>], iteration_bounds = array<i64: 1>, scalar_prefetch = 0 : i64, scratch_operands = 0 : i64, tpu.core_type = #tpu.core_type<tc>, window_params = [{transform_indices = @transform_0, window_bounds = array<i64: 16, 128>}, {transform_indices = @transform_1, window_bounds = array<i64: 16, 128>}, {transform_indices = @transform_2, window_bounds = array<i64: 16, 128>}, {transform_indices = @transform_3, window_bounds = array<i64: 16, 128>}]} {
    %c0 = arith.constant 0 : index
    %c0_0 = arith.constant 0 : index
    %0 = vector.load %arg1[%c0, %c0_0] : memref<16x128xi32, #tpu.memory_space<vmem>>, vector<8x128xi32>
    %c8 = arith.constant 8 : index
    %c0_1 = arith.constant 0 : index
    %1 = vector.load %arg1[%c8, %c0_1] : memref<16x128xi32, #tpu.memory_space<vmem>>, vector<8x128xi32>
    %c16777215_i32 = arith.constant 16777215 : i32
    %2 = vector.broadcast %c16777215_i32 : i32 to vector<8x128xi32>
    %3 = arith.andi %0, %2 : vector<8x128xi32>
    %4 = arith.sitofp %3 : vector<8x128xi32> to vector<8x128xf32>
    %cst = arith.constant 1.000000e+00 : f32
    %5 = vector.broadcast %cst : f32 to vector<8x128xf32>
    %6 = arith.addf %4, %5 : vector<8x128xf32>
    %cst_2 = arith.constant 5.96046448E-8 : f32
    %7 = vector.broadcast %cst_2 : f32 to vector<8x128xf32>
    %8 = arith.mulf %6, %7 : vector<8x128xf32>
    %c16777215_i32_3 = arith.constant 16777215 : i32
    %9 = vector.broadcast %c16777215_i32_3 : i32 to vector<8x128xi32>
    %10 = arith.andi %1, %9 : vector<8x128xi32>
    %11 = arith.sitofp %10 : vector<8x128xi32> to vector<8x128xf32>
    %cst_4 = arith.constant 5.96046448E-8 : f32
    %12 = vector.broadcast %cst_4 : f32 to vector<8x128xf32>
    %13 = arith.mulf %11, %12 : vector<8x128xf32>
    %14 = math.log %8 : vector<8x128xf32>
    %cst_5 = arith.constant -2.000000e+00 : f32
    %15 = vector.broadcast %cst_5 : f32 to vector<8x128xf32>
    %16 = arith.mulf %15, %14 : vector<8x128xf32>
    %17 = math.sqrt %16 : vector<8x128xf32>
    %cst_6 = arith.constant 6.28318548 : f32
    %18 = vector.broadcast %cst_6 : f32 to vector<8x128xf32>
    %19 = arith.mulf %18, %13 : vector<8x128xf32>
    %20 = math.cos %19 : vector<8x128xf32>
    %21 = arith.mulf %17, %20 : vector<8x128xf32>
    %22 = math.sin %19 : vector<8x128xf32>
    %23 = arith.mulf %17, %22 : vector<8x128xf32>
    %c0_7 = arith.constant 0 : index
    %c0_8 = arith.constant 0 : index
    %24 = vector.load %arg2[%c0_7, %c0_8] : memref<16x128xf32, #tpu.memory_space<vmem>>, vector<8x128xf32>
    %c8_9 = arith.constant 8 : index
    %c0_10 = arith.constant 0 : index
    %25 = vector.load %arg2[%c8_9, %c0_10] : memref<16x128xf32, #tpu.memory_space<vmem>>, vector<8x128xf32>
    %c0_11 = arith.constant 0 : index
    %c0_12 = arith.constant 0 : index
    %26 = vector.load %arg3[%c0_11, %c0_12] : memref<16x128xf32, #tpu.memory_space<vmem>>, vector<8x128xf32>
    %27 = math.exp %26 : vector<8x128xf32>
    %c8_13 = arith.constant 8 : index
    %c0_14 = arith.constant 0 : index
    %28 = vector.load %arg3[%c8_13, %c0_14] : memref<16x128xf32, #tpu.memory_space<vmem>>, vector<8x128xf32>
    %29 = math.exp %28 : vector<8x128xf32>
    %30 = arith.mulf %27, %21 : vector<8x128xf32>
    %31 = arith.addf %24, %30 : vector<8x128xf32>
    %c0_15 = arith.constant 0 : index
    %c0_16 = arith.constant 0 : index
    %32 = vector.load %arg4[%c0_15, %c0_16] : memref<16x128xf32, #tpu.memory_space<vmem>>, vector<8x128xf32>
    tpu.vector_store %arg4[%c0_15, %c0_16], %31 {strides = array<i32>} : memref<16x128xf32, #tpu.memory_space<vmem>>, vector<8x128xf32>,
    %33 = arith.mulf %29, %23 : vector<8x128xf32>
    %34 = arith.addf %25, %33 : vector<8x128xf32>
    %c8_17 = arith.constant 8 : index
    %c0_18 = arith.constant 0 : index
    %35 = vector.load %arg4[%c8_17, %c0_18] : memref<16x128xf32, #tpu.memory_space<vmem>>, vector<8x128xf32>
    tpu.vector_store %arg4[%c8_17, %c0_18], %34 {strides = array<i32>} : memref<16x128xf32, #tpu.memory_space<vmem>>, vector<8x128xf32>,
    return
  }
  func.func @transform_0(%arg0: i32) -> (i32, i32) {
    %c0_i32 = arith.constant 0 : i32
    %c0_i32_0 = arith.constant 0 : i32
    return %arg0, %c0_i32 : i32, i32
  }
  func.func @transform_1(%arg0: i32) -> (i32, i32) {
    %c0_i32 = arith.constant 0 : i32
    %c0_i32_0 = arith.constant 0 : i32
    return %arg0, %c0_i32 : i32, i32
  }
  func.func @transform_2(%arg0: i32) -> (i32, i32) {
    %c0_i32 = arith.constant 0 : i32
    %c0_i32_0 = arith.constant 0 : i32
    return %arg0, %c0_i32 : i32, i32
  }
  func.func @transform_3(%arg0: i32) -> (i32, i32) {
    %c0_i32 = arith.constant 0 : i32
    %c0_i32_0 = arith.constant 0 : i32
    return %arg0, %c0_i32 : i32, i32
  }
}

</mosaic_0001>

<llo_original>
// kernel: tpu_custom_call.1
$region0: #{tpu_custom_call.1}
  #allocation0 [shape = 'u32[]', space=smem, size = 0x4, offset = 0x4, fixed_abs, tag = 'smem constant byte address 0x4 - core index']
  #allocation1 [shape = 'u32[144,128]{1,0:T(1,128)}', space=vmem, size = 0x12000, scoped, tag = 'internal scratch']
  %s0 = inlined_call_operand.hbm [shape: s32[16,128], index: 0, kind: input, shape index: {}]
  %s1 = inlined_call_operand.hbm [shape: f32[16,128], index: 1, kind: input, shape index: {}]
  %s2 = inlined_call_operand.hbm [shape: f32[16,128], index: 2, kind: input, shape index: {}]
  %s3 = inlined_call_operand.hbm [shape: f32[16,128], index: 3, kind: output, shape index: {}]
  %s4 = sld [smem:[#allocation0]]
  $region34: #{tpu_custom_call.1} parent=0
    _
  %s6 = ssub.s32 1, %s4
  %s7 = scalar_select 0, %s6, %s4
  $region1: #{tpu_custom_call.1} parent=0
    #allocation2 [shape = 'u8[8192]{0}', space=vmem, size = 0x2000, scoped, tag = 'input window, operand 0, single buffered']
    #allocation3 [shape = 's32[1]{0}', space=sflag, size = 0x4, scoped, tag = 'scoped memory for tpu_custom_call.1']
    #allocation4 [shape = 's32[1]{0}', space=sflag, size = 0x4, scoped, tag = 'scoped memory for tpu_custom_call.1']
    #allocation5 [shape = 'u8[8192]{0}', space=vmem, size = 0x2000, scoped, tag = 'input window, operand 1, single buffered']
    #allocation6 [shape = 's32[1]{0}', space=sflag, size = 0x4, scoped, tag = 'scoped memory for tpu_custom_call.1']
    #allocation7 [shape = 'u8[8192]{0}', space=vmem, size = 0x2000, scoped, tag = 'input window, operand 2, single buffered']
    #allocation8 [shape = 'u8[8192]{0}', space=vmem, size = 0x2000, scoped, tag = 'output window, operand 0, single buffered']
    %8 = vsyncpa [#allocation3], 0
    %9 = vsyncpa [#allocation6], 0
    %10 = vsyncpa [#allocation4], 0
    // Predicated region
    $region2: #{tpu_custom_call.1} parent=1 // pred_check
      _
    $region3: #{tpu_custom_call.1} parent=1 // pred_check_branch
      %12 = sbr.rel (0) target = $region5
    $region4: #{tpu_custom_call.1} parent=1 // pred_region
      %s14 = ssub.s32 256, 256
      %15 = vsyncadd [#allocation3], %s14
      %s16 = sshll.u32 [#allocation2], 4
      %s17 = int_to_ptr.vmem [resolvable:$true] %s16
      %22 = dma.hbm_to_vmem [thread:$0]  %s0, 256, %s17, [#allocation3], 128, 128, 8
    $region5: #{tpu_custom_call.1} parent=1 // pred_fallthru
      _
    // Predicated region
    $region6: #{tpu_custom_call.1} parent=1 // pred_check
      _
    $region7: #{tpu_custom_call.1} parent=1 // pred_check_branch
      %24 = sbr.rel (0) target = $region9
    $region8: #{tpu_custom_call.1} parent=1 // pred_region
      %s26 = ssub.s32 256, 256
      %27 = vsyncadd [#allocation6], %s26
      %s28 = sshll.u32 [#allocation5], 4
      %s29 = int_to_ptr.vmem [resolvable:$true] %s28
      %34 = dma.hbm_to_vmem [thread:$0]  %s1, 256, %s29, [#allocation6], 128, 128, 8
    $region9: #{tpu_custom_call.1} parent=1 // pred_fallthru
      _
    // Predicated region
    $region10: #{tpu_custom_call.1} parent=1 // pred_check
      _
    $region11: #{tpu_custom_call.1} parent=1 // pred_check_branch
      %36 = sbr.rel (0) target = $region13
    $region12: #{tpu_custom_call.1} parent=1 // pred_region
      %s38 = ssub.s32 256, 256
      %39 = vsyncadd [#allocation6], %s38
      %s40 = sshll.u32 [#allocation7], 4
      %s41 = int_to_ptr.vmem [resolvable:$true] %s40
      %46 = dma.hbm_to_vmem [thread:$0]  %s2, 256, %s41, [#allocation6], 128, 128, 8
    $region13: #{tpu_custom_call.1} parent=1 // pred_fallthru
      _
    // Predicated region
    $region14: #{tpu_custom_call.1} parent=1 // pred_check
      _
    $region15: #{tpu_custom_call.1} parent=1 // pred_check_branch
      %48 = sbr.rel (0) target = $region17
    $region16: #{tpu_custom_call.1} parent=1 // pred_region
      %49 = dma.done [#allocation3], 256
    $region17: #{tpu_custom_call.1} parent=1 // pred_fallthru
      _
    // Predicated region
    $region18: #{tpu_custom_call.1} parent=1 // pred_check
      _
    $region19: #{tpu_custom_call.1} parent=1 // pred_check_branch
      %51 = sbr.rel (0) target = $region21
    $region20: #{tpu_custom_call.1} parent=1 // pred_region
      %52 = dma.done [#allocation6], 256
    $region21: #{tpu_custom_call.1} parent=1 // pred_fallthru
      _
    // Predicated region
    $region22: #{tpu_custom_call.1} parent=1 // pred_check
      _
    $region23: #{tpu_custom_call.1} parent=1 // pred_check_branch
      %54 = sbr.rel (0) target = $region25
    $region24: #{tpu_custom_call.1} parent=1 // pred_region
      %55 = dma.done [#allocation6], 256
    $region25: #{tpu_custom_call.1} parent=1 // pred_fallthru
      _
    %v56 = vld [vmem:[#allocation2] sm:$0xff]
    %v57 = vld [vmem:[#allocation2 + $0x8] sm:$0xff]
    %v58 = vand.u32 %v56, 16777215
    %v59 = vcvt.s32.f32 %v58
    %v60 = vadd.f32 %v59, 1.0
    %v61 = vmul.f32 %v60, 5.9604645e-08
    %v62 = vand.u32 %v57, 16777215
    %v63 = vcvt.s32.f32 %v62
    %v64 = vmul.f32 %v63, 5.9604645e-08
    %v65 = vlog2.pop %v61
    %v66 = vmul.f32 %v65, 0.6931472
    %v67 = vmul.f32 %v66, -2.0
    %v68 = vrsqrt.pop %v67
    %v69 = vmul.f32 %v67, %v68
    %vm70 = vcmp.eq.f32.partialorder %v67, inf
    %v71 = vsel %vm70, %v67, %v69
    %vm72 = vcmp.eq.f32.partialorder %v67, 0.0
    %v73 = vand.u32 %v67, 2147483648
    %v74 = vsel %vm72, %v73, %v71
    %v75 = vmul.f32 %v64, 6.2831855
    %v76 = vand.u32 2147483647, %v75
    %vm77 = vcmp.le.f32.partialorder %v76, 0.7853982
    %vm78 = vcmp.lt.s32.totalorder %v75, 0
    %v79 = vand.u32 %v75, 2139095040
    %v80 = vshrl.u32 %v79, 23
    %v81 = vsub.s32 %v80, 127
    %v82 = vand.u32 2147483647, %v75
    %v83 = vand.u32 %v82, 8388607
    %v84 = vor.u32 %v83, 8388608
    %v85 = vsub.s32 0, %v84
    %v86 = vadd.s32 %v81, 1
    %vm87 = vcmp.gt.s32.totalorder %v86, 0
    %v88 = vsel %vm87, %v86, 0
    %v89 = vshrl.u32 %v88, 5
    %v90 = vand.u32 %v88, 31
    %v91 = vsub.s32 32, %v90
    %v92 = vshrl.u32 683565275, %v91
    %v93 = vshll.u32 683565275, %v90
    %v94 = vshrl.u32 2475754826, %v91
    %v95 = vor.u32 %v93, %v94
    %v96 = vshll.u32 2475754826, %v90
    %v97 = vshrl.u32 2131351028, %v91
    %v98 = vor.u32 %v96, %v97
    %v99 = vshll.u32 2131351028, %v90
    %v100 = vshrl.u32 2102212464, %v91
    %v101 = vor.u32 %v99, %v100
    %v102 = vshll.u32 2102212464, %v90
    %v103 = vshrl.u32 920167782, %v91
    %v104 = vor.u32 %v102, %v103
    %v105 = vshll.u32 920167782, %v90
    %v106 = vshrl.u32 1326507024, %v91
    %v107 = vor.u32 %v105, %v106
    %vm108 = vcmp.lt.s32.totalorder %v89, 1
    %vm109 = vcmp.lt.s32.totalorder %v89, 2
    %vm110 = vcmp.lt.s32.totalorder %v89, 3
    %vm111 = vcmp.lt.s32.totalorder %v89, 4
    %v112 = vsel %vm108, %v92, %v95
    %v113 = vsel %vm111, %v101, 2102212464
    %v114 = vsel %vm110, %v98, %v113
    %v115 = vsel %vm109, %v112, %v114
    %v116 = vsel %vm108, %v95, %v98
    %v117 = vsel %vm111, %v104, 920167782
    %v118 = vsel %vm110, %v101, %v117
    %v119 = vsel %vm109, %v116, %v118
    %v120 = vsel %vm108, %v98, %v101
    %v121 = vsel %vm111, %v107, 1326507024
    %v122 = vsel %vm110, %v104, %v121
    %v123 = vsel %vm109, %v120, %v122
    %v124 = vshll.u32 %v84, 8
    %v125 = vmul.u32.u64.compose %v124, %v123
    %v126 = vextract.low.u32 %v125
    %v127 = vextract.high.u32 %v125
    %v128 = vmul.u32.u64.compose %v124, %v119
    %v129 = vextract.low.u32 %v128
    %v130 = vextract.high.u32 %v128
    %v131 = vmul.u32 %v124, %v115
    %v132 = vadd.s32 %v127, %v129
    %vm133 = vc.u32 %v127, %v129
    %v134 = vadd.s32 %v130, 1
    %v135 = vsel %vm133, %v134, %v130
    %v136 = vadd.s32 %v131, %v135
    %v137 = vadd.s32 %v136, 536870912
    %v138 = vshrl.u32 %v137, 30
    %v139 = vshll.u32 %v138, 30
    %v140 = vsub.s32 %v136, %v139
    %vm141 = vcmp.lt.s32.totalorder %v140, 0
    %v142 = vsub.s32 0, %v140
    %v143 = vsel %vm141, %v142, %v140
    %v144 = vclz %v143
    %v145 = vsub.s32 %v144, 2
    %vm146 = vcmp.gt.s32.totalorder 0, %v145
    %v147 = vsel %vm146, 0, %v145
    %v148 = vsub.s32 32, %v147
    %v149 = vshll.u32 %v140, %v147
    %v150 = vshrl.u32 %v132, %v148
    %v151 = vor.u32 %v149, %v150
    %v152 = vsub.s32 4294967266, %v147
    %v153 = vadd.s32 %v152, 127
    %v154 = vshll.u32 %v153, 23
    %v155 = vor.u32 4788187, %v154
    %v156 = vand.u32 2147483647, %v155
    %v158 = vcvt.s32.f32 %v151
    %v159 = vmul.f32 %v158, %v156
    %v160 = vxor.u32 %v159, 2147483648
    %v161 = vsel %vm78, %v160, %v159
    %v162 = vsub.s32 4, %v138
    %v163 = vsel %vm78, %v162, %v138
    %v164 = vsel %vm77, %v75, %v161
    %v165 = vsel %vm77, 0, %v163
    %v166 = vcosq.f32.pop %v164
    %v167 = vsinq.f32.pop %v164
    %vm168 = vweird.f32 %v75
    %v169 = vand.u32 %v165, 3
    %vm170 = vcmp.lt.s32.totalorder %v169, 2
    %vm171 = vcmp.eq.s32.totalorder %v169, 0
    %v172 = vxor.u32 %v167, 2147483648
    %v173 = vsel %vm171, %v166, %v172
    %vm174 = vcmp.eq.s32.totalorder %v169, 2
    %v175 = vxor.u32 %v166, 2147483648
    %v176 = vsel %vm174, %v175, %v167
    %v177 = vsel %vm170, %v173, %v176
    %v178 = vsel %vm168, nan, %v177
    %v179 = vmul.f32 %v74, %v178
    %v180 = vand.u32 2147483647, %v75
    %vm181 = vcmp.le.f32.partialorder %v180, 0.7853982
    %vm182 = vcmp.lt.s32.totalorder %v75, 0
    %v183 = vand.u32 %v75, 2139095040
    %v184 = vshrl.u32 %v183, 23
    %v185 = vsub.s32 %v184, 127
    %v186 = vand.u32 2147483647, %v75
    %v187 = vand.u32 %v186, 8388607
    %v188 = vor.u32 %v187, 8388608
    %v189 = vsub.s32 0, %v188
    %v190 = vadd.s32 %v185, 1
    %vm191 = vcmp.gt.s32.totalorder %v190, 0
    %v192 = vsel %vm191, %v190, 0
    %v193 = vshrl.u32 %v192, 5
    %v194 = vand.u32 %v192, 31
    %v195 = vsub.s32 32, %v194
    %v196 = vshrl.u32 683565275, %v195
    %v197 = vshll.u32 683565275, %v194
    %v198 = vshrl.u32 2475754826, %v195
    %v199 = vor.u32 %v197, %v198
    %v200 = vshll.u32 2475754826, %v194
    %v201 = vshrl.u32 2131351028, %v195
    %v202 = vor.u32 %v200, %v201
    %v203 = vshll.u32 2131351028, %v194
    %v204 = vshrl.u32 2102212464, %v195
    %v205 = vor.u32 %v203, %v204
    %v206 = vshll.u32 2102212464, %v194
    %v207 = vshrl.u32 920167782, %v195
    %v208 = vor.u32 %v206, %v207
    %v209 = vshll.u32 920167782, %v194
    %v210 = vshrl.u32 1326507024, %v195
    %v211 = vor.u32 %v209, %v210
    %vm212 = vcmp.lt.s32.totalorder %v193, 1
    %vm213 = vcmp.lt.s32.totalorder %v193, 2
    %vm214 = vcmp.lt.s32.totalorder %v193, 3
    %vm215 = vcmp.lt.s32.totalorder %v193, 4
    %v216 = vsel %vm212, %v196, %v199
    %v217 = vsel %vm215, %v205, 2102212464
    %v218 = vsel %vm214, %v202, %v217
    %v219 = vsel %vm213, %v216, %v218
    %v220 = vsel %vm212, %v199, %v202
    %v221 = vsel %vm215, %v208, 920167782
    %v222 = vsel %vm214, %v205, %v221
    %v223 = vsel %vm213, %v220, %v222
    %v224 = vsel %vm212, %v202, %v205
    %v225 = vsel %vm215, %v211, 1326507024
    %v226 = vsel %vm214, %v208, %v225
    %v227 = vsel %vm213, %v224, %v226
    %v228 = vshll.u32 %v188, 8
    %v229 = vmul.u32.u64.compose %v228, %v227
    %v230 = vextract.low.u32 %v229
    %v231 = vextract.high.u32 %v229
    %v232 = vmul.u32.u64.compose %v228, %v223
    %v233 = vextract.low.u32 %v232
    %v234 = vextract.high.u32 %v232
    %v235 = vmul.u32 %v228, %v219
    %v236 = vadd.s32 %v231, %v233
    %vm237 = vc.u32 %v231, %v233
    %v238 = vadd.s32 %v234, 1
    %v239 = vsel %vm237, %v238, %v234
    %v240 = vadd.s32 %v235, %v239
    %v241 = vadd.s32 %v240, 536870912
    %v242 = vshrl.u32 %v241, 30
    %v243 = vshll.u32 %v242, 30
    %v244 = vsub.s32 %v240, %v243
    %vm245 = vcmp.lt.s32.totalorder %v244, 0
    %v246 = vsub.s32 0, %v244
    %v247 = vsel %vm245, %v246, %v244
    %v248 = vclz %v247
    %v249 = vsub.s32 %v248, 2
    %vm250 = vcmp.gt.s32.totalorder 0, %v249
    %v251 = vsel %vm250, 0, %v249
    %v252 = vsub.s32 32, %v251
    %v253 = vshll.u32 %v244, %v251
    %v254 = vshrl.u32 %v236, %v252
    %v255 = vor.u32 %v253, %v254
    %v256 = vsub.s32 4294967266, %v251
    %v257 = vadd.s32 %v256, 127
    %v258 = vshll.u32 %v257, 23
    %v259 = vor.u32 4788187, %v258
    %v260 = vand.u32 2147483647, %v259
    %v262 = vcvt.s32.f32 %v255
    %v263 = vmul.f32 %v262, %v260
    %v264 = vxor.u32 %v263, 2147483648
    %v265 = vsel %vm182, %v264, %v263
    %v266 = vsub.s32 4, %v242
    %v267 = vsel %vm182, %v266, %v242
    %v268 = vsel %vm181, %v75, %v265
    %v269 = vsel %vm181, 0, %v267
    %v270 = vcosq.f32.pop %v268
    %v271 = vsinq.f32.pop %v268
    %vm272 = vweird.f32 %v75
    %v273 = vadd.s32 %v269, 3
    %v274 = vand.u32 %v273, 3
    %vm275 = vcmp.lt.s32.totalorder %v274, 2
    %vm276 = vcmp.eq.s32.totalorder %v274, 0
    %v277 = vxor.u32 %v271, 2147483648
    %v278 = vsel %vm276, %v270, %v277
    %vm279 = vcmp.eq.s32.totalorder %v274, 2
    %v280 = vxor.u32 %v270, 2147483648
    %v281 = vsel %vm279, %v280, %v271
    %v282 = vsel %vm275, %v278, %v281
    %v283 = vsel %vm272, nan, %v282
    %v284 = vmul.f32 %v74, %v283
    %v285 = vld [vmem:[#allocation5] sm:$0xff]
    %v286 = vld [vmem:[#allocation5 + $0x8] sm:$0xff]
    %v287 = vld [vmem:[#allocation7] sm:$0xff]
    %v288 = vmul.f32 %v287, 1.442695
    %v289 = vpow.pop %v288
    %v290 = vld [vmem:[#allocation7 + $0x8] sm:$0xff]
    %v291 = vmul.f32 %v290, 1.442695
    %v292 = vpow.pop %v291
    %v293 = vmul.f32 %v289, %v179
    %v294 = vadd.f32 %v285, %v293
    %295 = vst [vmem:[#allocation8] sm:$0xff] %v294
    %v296 = vmul.f32 %v292, %v284
    %v297 = vadd.f32 %v286, %v296
    %298 = vst [vmem:[#allocation8 + $0x8] sm:$0xff] %v297
    // Predicated region
    $region26: #{tpu_custom_call.1} parent=1 // pred_check
      _
    $region27: #{tpu_custom_call.1} parent=1 // pred_check_branch
      %300 = sbr.rel (0) target = $region29
    $region28: #{tpu_custom_call.1} parent=1 // pred_region
      %s302 = ssub.s32 256, 256
      %303 = vsyncadd [#allocation4], %s302
      %s304 = sshll.u32 [#allocation8], 4
      %s305 = int_to_ptr.vmem [resolvable:$true] %s304
      %310 = dma.vmem_to_hbm [thread:$0]  %s305, 256, %s3, [#allocation4], 128, 128, 8
    $region29: #{tpu_custom_call.1} parent=1 // pred_fallthru
      _
    // Predicated region
    $region30: #{tpu_custom_call.1} parent=1 // pred_check
      _
    $region31: #{tpu_custom_call.1} parent=1 // pred_check_branch
      %312 = sbr.rel (0) target = $region33
    $region32: #{tpu_custom_call.1} parent=1 // pred_region
      %313 = dma.done [#allocation4], 256
    $region33: #{tpu_custom_call.1} parent=1 // pred_fallthru
      _
    %314 = vsyncpa [#allocation3], 1
    %315 = vsyncpa [#allocation6], 1
    %316 = vsyncpa [#allocation4], 1

</llo_original>
